<compile_context>
chip_gen: v5e
topology: v5e:2x2
jax: 0.10.0
libtpu: 0.0.40
codegen_flags: <defaults>
</compile_context>

<pallas_src>
import functools

import jax
import jax.numpy as jnp
from jax.experimental import pallas as pl
from jax.experimental.pallas import tpu as pltpu


def _round_up(x, m):
    return ((x + m - 1) // m) * m


# ---------------------------------------------------------------------------
# Kernel body: the whole MLP for one row tile.
# refs = (w0, b0, w1, b1, ..., w_{L-1}, b_{L-1}, o_ref)
#   x_ref : (tm, D_in)   activation tile, caller's native dtype
#   w_i   : (K_i, N_i)   weights in matmul_dtype, grid-invariant
#   b_i   : (1,  N_i)    f32 biases, grid-invariant
#   o_ref : (tm, N_pad)  final output tile (the only HBM store)
# ---------------------------------------------------------------------------
def _fused_mlp_kernel(x_ref, *refs, n_layers, n_hidden, matmul_dtype):
    o_ref = refs[-1]
    wb = refs[:-1]
    # Single cast from the caller's native dtype inside the kernel (module does
    # x.float(); the exact path uses matmul_dtype=float32, the fast path rounds
    # to bf16 here rather than in a separate pre-kernel XLA op).
    h = x_ref[...].astype(matmul_dtype)
    for li in range(n_layers):
        w = wb[2 * li][...]            # (K, N) already matmul_dtype
        b = wb[2 * li + 1][...]        # (1, N) f32, broadcasts over rows
        y = jnp.dot(h, w, preferred_element_type=jnp.float32) + b
        if li < n_hidden:              # ReLU on hidden layers only
            y = jnp.maximum(y, 0.0)
        # Carry inter-layer activations in matmul_dtype (halves the VMEM/vreg
        # footprint on the bf16 path); last layer stays f32 until the store.
        h = y.astype(matmul_dtype) if li + 1 < n_layers else y
    o_ref[...] = h.astype(o_ref.dtype)


# ---------------------------------------------------------------------------
# One-time parameter preparation (hoisted out of the forward wrapper).
# ---------------------------------------------------------------------------
def prepare_mlp_params(params, n_hidden, *, matmul_dtype=jnp.bfloat16):
    """Pads the last layer 25->32 (dense sublane packing of the only HBM
    store), casts weights to matmul_dtype and reshapes biases to (1, N)."""
    n_layers = len(params)
    out_dim = params[-1][0].shape[1]
    out_pad = _round_up(out_dim, 8)
    flat_wb = []
    for li, (w, b) in enumerate(params):
        if li == n_layers - 1 and out_pad != out_dim:
            w = jnp.pad(w, ((0, 0), (0, out_pad - out_dim)))
            b = jnp.pad(b, (0, out_pad - out_dim))
        flat_wb.append(jnp.asarray(w, matmul_dtype))
        flat_wb.append(jnp.asarray(b, jnp.float32).reshape(1, -1))
    max_width = max([w.shape[1] for w, _ in params] + [out_pad])
    return dict(flat_wb=tuple(flat_wb), n_layers=n_layers, n_hidden=n_hidden,
                out_dim=out_dim, out_pad=out_pad, matmul_dtype=matmul_dtype,
                max_width=max_width)


def _choose_tile_m(M, per_row_bytes, tile_m, vmem_budget_bytes):
    """Largest row tile under the VMEM budget; >=2 grid steps when M is big."""
    if M <= 8:
        return max(M, 1)
    cap = max(8, (vmem_budget_bytes // max(per_row_bytes, 1)) // 8 * 8)
    tm = min(tile_m, cap, (M // 8) * 8)
    # v7x megacore: if everything fits in one tile but M is sizable, split into
    # two tiles so dimension_semantics=("parallel",) can use both TensorCores.
    if M <= tm and M >= 256:
        half = _round_up(-(-M // 2), 8)
        tm = min(tm, half)
    return tm


# ---------------------------------------------------------------------------
# Forward wrapper.
# ---------------------------------------------------------------------------
def mlp_pallas(x, prepared, *, tile_m=4096, vmem_budget_bytes=12 << 20,
               out_dtype=jnp.float32):
    """x: (batch, num_fields, embed_dim) -> (batch, num_fields, out_dim).

    `prepared` comes from prepare_mlp_params().  Use out_dtype=jnp.bfloat16 if
    downstream tolerates it (output bytes dominate the kernel's HBM traffic).
    """
    batch, fields, feat = x.shape
    M = batch * fields
    h2d = x.reshape(M, feat)          # fed in native dtype -- no pre-cast

    flat_wb = prepared["flat_wb"]
    n_layers = prepared["n_layers"]
    n_hidden = prepared["n_hidden"]
    out_dim = prepared["out_dim"]
    out_pad = prepared["out_pad"]
    matmul_dtype = prepared["matmul_dtype"]
    max_width = prepared["max_width"]

    x_isz = h2d.dtype.itemsize
    out_isz = jnp.dtype(out_dtype).itemsize
    mm_isz = jnp.dtype(matmul_dtype).itemsize
    # Double-buffered in/out tiles + f32/matmul_dtype intermediates per row.
    per_row_bytes = (2 * feat * x_isz + 2 * out_pad * out_isz
                     + max_width * (4 + mm_isz))
    tm = _choose_tile_m(M, per_row_bytes, tile_m, vmem_budget_bytes)
    grid = (pl.cdiv(M, tm),)

    wb_bytes = sum(int(a.size) * a.dtype.itemsize for a in flat_wb)
    # Explicit scoped-VMEM limit: generous headroom, but stays under v7x's
    # 64 MiB physical VMEM per TensorCore.
    vmem_limit = int(min(48 << 20,
                         max(16 << 20, 2 * (tm * per_row_bytes + wb_bytes))))

    # Full-array blocks + constant index_map -> weights/biases stay
    # VMEM-resident across all grid steps (no per-step DMA).
    in_specs = [pl.BlockSpec((tm, feat), lambda i: (i, 0))]
    for a in flat_wb:
        in_specs.append(pl.BlockSpec(a.shape, lambda i: (0, 0)))
    out_spec = pl.BlockSpec((tm, out_pad), lambda i: (i, 0))

    flops = 2 * M * sum(w.shape[0] * w.shape[1] for w in flat_wb[0::2])
    bytes_accessed = M * feat * x_isz + M * out_pad * out_isz + wb_bytes

    kernel = functools.partial(_fused_mlp_kernel, n_layers=n_layers,
                               n_hidden=n_hidden, matmul_dtype=matmul_dtype)

    out = pl.pallas_call(
        kernel,
        out_shape=jax.ShapeDtypeStruct((M, out_pad), out_dtype),
        grid=grid,
        in_specs=in_specs,
        out_specs=out_spec,
        compiler_params=pltpu.CompilerParams(
            dimension_semantics=("parallel",),   # megacore-shard rows on v7x
            vmem_limit_bytes=vmem_limit,
        ),
        cost_estimate=pl.CostEstimate(
            flops=int(flops), transcendentals=0,
            bytes_accessed=int(bytes_accessed)),
    )(h2d, *flat_wb)

    return out[:, :out_dim].reshape(batch, fields, out_dim)


def init_mlp_params(key, input_dim, embed_dims, output_layer=True):
    """Deterministic init mirroring nn.Linear default U(-1/sqrt(fan_in), +)."""
    params = []
    in_dim = input_dim
    dims = list(embed_dims) + ([25] if output_layer else [])
    for out_dim in dims:
        key, kw, kb = jax.random.split(key, 3)
        bound = 1.0 / jnp.sqrt(jnp.float32(in_dim))
        w = jax.random.uniform(kw, (in_dim, out_dim), jnp.float32, -bound, bound)
        b = jax.random.uniform(kb, (out_dim,), jnp.float32, -bound, bound)
        params.append((w, b))
        in_dim = out_dim
    return params


if __name__ == "__main__":
    # Small shapes consistent with the module: (batch, num_fields, embed_dim)
    batch, num_fields, input_dim = 2, 4, 16
    embed_dims = (32, 32)

    key = jax.random.PRNGKey(0)
    kx, kp = jax.random.split(key)
    x = jax.random.normal(kx, (batch, num_fields, input_dim), jnp.float32)
    params = init_mlp_params(kp, input_dim, embed_dims, output_layer=True)

    # One-time weight prep (bf16 fast path and exact f32 path).
    prep_bf16 = prepare_mlp_params(params, n_hidden=len(embed_dims),
                                   matmul_dtype=jnp.bfloat16)
    prep_f32 = prepare_mlp_params(params, n_hidden=len(embed_dims),
                                  matmul_dtype=jnp.float32)

    # Reference forward (plain JAX); `cast` mimics the kernel's bf16 carrying.
    def ref_forward(xa, cast):
        h = xa.reshape(-1, input_dim).astype(jnp.float32)
        if cast is not None:
            h = h.astype(cast)
        for li, (w, b) in enumerate(params):
            wm = w.astype(cast) if cast is not None else w
            y = jnp.dot(h, wm, preferred_element_type=jnp.float32) + b
            if li < len(embed_dims):
                y = jnp.maximum(y, 0.0)
            if cast is not None and li + 1 < len(params):
                y = y.astype(cast)
            h = y
        return h.reshape(xa.shape[0], xa.shape[1], -1)

    # --- bf16 fast path, tiny M (single tile) ---
    out = jax.block_until_ready(mlp_pallas(x, prep_bf16))
    assert out.shape == (batch, num_fields, 25), out.shape
    ref_bf16 = ref_forward(x, jnp.bfloat16)
    assert jnp.allclose(out, ref_bf16, atol=1e-4, rtol=1e-4), \
        float(jnp.max(jnp.abs(out - ref_bf16)))
    ref_f32 = ref_forward(x, None)
    assert jnp.allclose(out, ref_f32, atol=5e-2, rtol=5e-2)

    # --- exact f32 path preserves torch module numerics ---
    out_f32 = jax.block_until_ready(mlp_pallas(x, prep_f32))
    assert jnp.allclose(out_f32, ref_f32, atol=1e-5, rtol=1e-5), \
        float(jnp.max(jnp.abs(out_f32 - ref_f32)))

    # --- larger M: exercises the >=2-grid-step (two TensorCore) tiling path ---
    batch2, fields2 = 64, 10                     # M = 640 -> two row tiles
    x2 = jax.random.normal(jax.random.PRNGKey(1),
                           (batch2, fields2, input_dim), jnp.float32)
    out2 = jax.block_until_ready(mlp_pallas(x2, prep_bf16))
    ref2 = ref_forward(x2, jnp.bfloat16)
    assert out2.shape == (batch2, fields2, 25)
    assert jnp.allclose(out2, ref2, atol=1e-4, rtol=1e-4), \
        float(jnp.max(jnp.abs(out2 - ref2)))

    print("KERNEL_OK")
</pallas_src>

<mosaic_0001>
module attributes {stable_mosaic.version = 11 : i64} {
  func.func @_fused_mlp_kernel(%arg0: i32, %arg1: memref<8x16xf32, #tpu.memory_space<vmem>>, %arg2: memref<16x32xbf16, #tpu.memory_space<vmem>>, %arg3: memref<1x32xf32, #tpu.memory_space<vmem>>, %arg4: memref<32x32xbf16, #tpu.memory_space<vmem>>, %arg5: memref<1x32xf32, #tpu.memory_space<vmem>>, %arg6: memref<32x32xbf16, #tpu.memory_space<vmem>>, %arg7: memref<1x32xf32, #tpu.memory_space<vmem>>, %arg8: memref<8x32xf32, #tpu.memory_space<vmem>>) attributes {dimension_semantics = [#tpu.dimension_semantics<parallel>], iteration_bounds = array<i64: 1>, scalar_prefetch = 0 : i64, scratch_operands = 0 : i64, tpu.core_type = #tpu.core_type<tc>, window_params = [{transform_indices = @transform_0, window_bounds = array<i64: 8, 16>}, {pipeline_mode = #tpu.pipeline_mode<synchronous>, transform_indices = @transform_1, window_bounds = array<i64: 16, 32>}, {pipeline_mode = #tpu.pipeline_mode<synchronous>, transform_indices = @transform_2, window_bounds = array<i64: 1, 32>}, {pipeline_mode = #tpu.pipeline_mode<synchronous>, transform_indices = @transform_3, window_bounds = array<i64: 32, 32>}, {pipeline_mode = #tpu.pipeline_mode<synchronous>, transform_indices = @transform_4, window_bounds = array<i64: 1, 32>}, {pipeline_mode = #tpu.pipeline_mode<synchronous>, transform_indices = @transform_5, window_bounds = array<i64: 32, 32>}, {pipeline_mode = #tpu.pipeline_mode<synchronous>, transform_indices = @transform_6, window_bounds = array<i64: 1, 32>}, {transform_indices = @transform_7, window_bounds = array<i64: 8, 32>}]} {
    %c0 = arith.constant 0 : index
    %c0_0 = arith.constant 0 : index
    %0 = vector.load %arg1[%c0, %c0_0] : memref<8x16xf32, #tpu.memory_space<vmem>>, vector<8x16xf32>
    %1 = arith.truncf %0 : vector<8x16xf32> to vector<8x16xbf16>
    %c0_1 = arith.constant 0 : index
    %c0_2 = arith.constant 0 : index
    %2 = vector.load %arg2[%c0_1, %c0_2] : memref<16x32xbf16, #tpu.memory_space<vmem>>, vector<16x32xbf16>
    %c0_3 = arith.constant 0 : index
    %c0_4 = arith.constant 0 : index
    %3 = vector.load %arg3[%c0_3, %c0_4] : memref<1x32xf32, #tpu.memory_space<vmem>>, vector<1x32xf32>
    %cst = arith.constant dense<0.000000e+00> : vector<8x32xf32>
    %4 = tpu.matmul %1, %2, %cst {dimension_numbers = #tpu.dot_dimension_numbers<[1], [0], [0], [1], [0, 0, 1, 1], [], []>} : vector<8x16xbf16>, vector<16x32xbf16>, vector<8x32xf32> -> vector<8x32xf32>
    %5 = vector.broadcast %3 : vector<1x32xf32> to vector<8x32xf32>
    %6 = arith.addf %4, %5 : vector<8x32xf32>
    %cst_5 = arith.constant 0.000000e+00 : f32
    %7 = vector.broadcast %cst_5 : f32 to vector<8x32xf32>
    %8 = arith.maximumf %6, %7 : vector<8x32xf32>
    %9 = arith.truncf %8 : vector<8x32xf32> to vector<8x32xbf16>
    %c0_6 = arith.constant 0 : index
    %c0_7 = arith.constant 0 : index
    %10 = vector.load %arg4[%c0_6, %c0_7] : memref<32x32xbf16, #tpu.memory_space<vmem>>, vector<32x32xbf16>
    %c0_8 = arith.constant 0 : index
    %c0_9 = arith.constant 0 : index
    %11 = vector.load %arg5[%c0_8, %c0_9] : memref<1x32xf32, #tpu.memory_space<vmem>>, vector<1x32xf32>
    %cst_10 = arith.constant dense<0.000000e+00> : vector<8x32xf32>
    %12 = tpu.matmul %9, %10, %cst_10 {dimension_numbers = #tpu.dot_dimension_numbers<[1], [0], [0], [1], [0, 0, 1, 1], [], []>} : vector<8x32xbf16>, vector<32x32xbf16>, vector<8x32xf32> -> vector<8x32xf32>
    %13 = vector.broadcast %11 : vector<1x32xf32> to vector<8x32xf32>
    %14 = arith.addf %12, %13 : vector<8x32xf32>
    %cst_11 = arith.constant 0.000000e+00 : f32
    %15 = vector.broadcast %cst_11 : f32 to vector<8x32xf32>
    %16 = arith.maximumf %14, %15 : vector<8x32xf32>
    %17 = arith.truncf %16 : vector<8x32xf32> to vector<8x32xbf16>
    %c0_12 = arith.constant 0 : index
    %c0_13 = arith.constant 0 : index
    %18 = vector.load %arg6[%c0_12, %c0_13] : memref<32x32xbf16, #tpu.memory_space<vmem>>, vector<32x32xbf16>
    %c0_14 = arith.constant 0 : index
    %c0_15 = arith.constant 0 : index
    %19 = vector.load %arg7[%c0_14, %c0_15] : memref<1x32xf32, #tpu.memory_space<vmem>>, vector<1x32xf32>
    %cst_16 = arith.constant dense<0.000000e+00> : vector<8x32xf32>
    %20 = tpu.matmul %17, %18, %cst_16 {dimension_numbers = #tpu.dot_dimension_numbers<[1], [0], [0], [1], [0, 0, 1, 1], [], []>} : vector<8x32xbf16>, vector<32x32xbf16>, vector<8x32xf32> -> vector<8x32xf32>
    %21 = vector.broadcast %19 : vector<1x32xf32> to vector<8x32xf32>
    %22 = arith.addf %20, %21 : vector<8x32xf32>
    %c0_17 = arith.constant 0 : index
    %c0_18 = arith.constant 0 : index
    %23 = vector.load %arg8[%c0_17, %c0_18] : memref<8x32xf32, #tpu.memory_space<vmem>>, vector<8x32xf32>
    tpu.vector_store %arg8[%c0_17, %c0_18], %22 {strides = array<i32>} : memref<8x32xf32, #tpu.memory_space<vmem>>, vector<8x32xf32>,
    return
  }
  func.func @transform_0(%arg0: i32) -> (i32, i32) {
    %c0_i32 = arith.constant 0 : i32
    %c0_i32_0 = arith.constant 0 : i32
    return %arg0, %c0_i32 : i32, i32
  }
  func.func @transform_1(%arg0: i32) -> (i32, i32) {
    %c0_i32 = arith.constant 0 : i32
    %c0_i32_0 = arith.constant 0 : i32
    %c0_i32_1 = arith.constant 0 : i32
    return %c0_i32, %c0_i32_0 : i32, i32
  }
  func.func @transform_2(%arg0: i32) -> (i32, i32) {
    %c0_i32 = arith.constant 0 : i32
    %c0_i32_0 = arith.constant 0 : i32
    %c0_i32_1 = arith.constant 0 : i32
    return %c0_i32, %c0_i32_0 : i32, i32
  }
  func.func @transform_3(%arg0: i32) -> (i32, i32) {
    %c0_i32 = arith.constant 0 : i32
    %c0_i32_0 = arith.constant 0 : i32
    %c0_i32_1 = arith.constant 0 : i32
    return %c0_i32, %c0_i32_0 : i32, i32
  }
  func.func @transform_4(%arg0: i32) -> (i32, i32) {
    %c0_i32 = arith.constant 0 : i32
    %c0_i32_0 = arith.constant 0 : i32
    %c0_i32_1 = arith.constant 0 : i32
    return %c0_i32, %c0_i32_0 : i32, i32
  }
  func.func @transform_5(%arg0: i32) -> (i32, i32) {
    %c0_i32 = arith.constant 0 : i32
    %c0_i32_0 = arith.constant 0 : i32
    %c0_i32_1 = arith.constant 0 : i32
    return %c0_i32, %c0_i32_0 : i32, i32
  }
  func.func @transform_6(%arg0: i32) -> (i32, i32) {
    %c0_i32 = arith.constant 0 : i32
    %c0_i32_0 = arith.constant 0 : i32
    %c0_i32_1 = arith.constant 0 : i32
    return %c0_i32, %c0_i32_0 : i32, i32
  }
  func.func @transform_7(%arg0: i32) -> (i32, i32) {
    %c0_i32 = arith.constant 0 : i32
    %c0_i32_0 = arith.constant 0 : i32
    return %arg0, %c0_i32 : i32, i32
  }
}

</mosaic_0001>

<llo_original>
// kernel: tpu_custom_call.1
$region0: #{tpu_custom_call.1}
  #allocation0 [shape = 'u32[]', space=smem, size = 0x4, offset = 0x4, fixed_abs, tag = 'smem constant byte address 0x4 - core index']
  #allocation1 [shape = 'u32[72,128]{1,0:T(1,128)}', space=vmem, size = 0x9000, scoped, tag = 'internal scratch']
  %s0 = inlined_call_operand.hbm [shape: f32[8,16], index: 0, kind: input, shape index: {}]
  %s1 = inlined_call_operand.hbm [shape: bf16[16,32], index: 1, kind: input, shape index: {}]
  %s2 = inlined_call_operand.vmem [shape: f32[1,32], index: 2, kind: input, shape index: {}]
  %s3 = inlined_call_operand.hbm [shape: bf16[32,32], index: 3, kind: input, shape index: {}]
  %s4 = inlined_call_operand.vmem [shape: f32[1,32], index: 4, kind: input, shape index: {}]
  %s5 = inlined_call_operand.hbm [shape: bf16[32,32], index: 5, kind: input, shape index: {}]
  %s6 = inlined_call_operand.vmem [shape: f32[1,32], index: 6, kind: input, shape index: {}]
  %s7 = inlined_call_operand.hbm [shape: f32[8,32], index: 7, kind: output, shape index: {}]
  %s8 = sld [smem:[#allocation0]]
  $region54: #{tpu_custom_call.1} parent=0
    _
  %s10 = ssub.s32 1, %s8
  %s11 = scalar_select 0, %s10, %s8
  $region1: #{tpu_custom_call.1} parent=0
    #allocation2 [shape = 'u8[4096]{0}', space=vmem, size = 0x1000, scoped, tag = 'input window, operand 0, single buffered']
    #allocation3 [shape = 's32[1]{0}', space=sflag, size = 0x4, scoped, tag = 'scoped memory for tpu_custom_call.1']
    #allocation4 [shape = 's32[1]{0}', space=sflag, size = 0x4, scoped, tag = 'scoped memory for tpu_custom_call.1']
    #allocation5 [shape = 'u8[4096]{0}', space=vmem, size = 0x1000, scoped, tag = 'input window, operand 1, single buffered']
    #allocation6 [shape = 's32[1]{0}', space=sflag, size = 0x4, scoped, tag = 'scoped memory for tpu_custom_call.1']
    #allocation7 [shape = 'u8[8192]{0}', space=vmem, size = 0x2000, scoped, tag = 'input window, operand 3, single buffered']
    #allocation8 [shape = 'u8[8192]{0}', space=vmem, size = 0x2000, scoped, tag = 'input window, operand 5, single buffered']
    #allocation9 [shape = 's32[1]{0}', space=sflag, size = 0x4, scoped, tag = 'scoped memory for tpu_custom_call.1']
    #allocation10 [shape = 'u8[4096]{0}', space=vmem, size = 0x1000, scoped, tag = 'output window, operand 0, single buffered']
    %12 = vsyncpa [#allocation3], 0
    %13 = vsyncpa [#allocation6], 0
    %14 = vsyncpa [#allocation9], 0
    %15 = vsyncpa [#allocation4], 0
    // Predicated region
    $region2: #{tpu_custom_call.1} parent=1 // pred_check
      _
    $region3: #{tpu_custom_call.1} parent=1 // pred_check_branch
      %17 = sbr.rel (0) target = $region5
    $region4: #{tpu_custom_call.1} parent=1 // pred_region
      %19 = vsyncadd [#allocation3], 0
      %s21 = sshll.u32 %s0, 4
      %s22 = int_to_ptr.hbm [resolvable:$true] %s21
      %s23 = sshll.u32 [#allocation2], 4
      %s24 = int_to_ptr.vmem [resolvable:$true] %s23
      %26 = dma.hbm_to_vmem [thread:$0]  %s22, 128, %s24, [#allocation3]
    $region5: #{tpu_custom_call.1} parent=1 // pred_fallthru
      _
    // Predicated region
    $region6: #{tpu_custom_call.1} parent=1 // pred_check
      _
    $region7: #{tpu_custom_call.1} parent=1 // pred_check_branch
      %28 = sbr.rel (0) target = $region9
    $region8: #{tpu_custom_call.1} parent=1 // pred_region
      %30 = vsyncadd [#allocation6], 0
      %s31 = sshll.u32 %s1, 4
      %s32 = int_to_ptr.hbm [resolvable:$true] %s31
      %s33 = sshll.u32 [#allocation5], 4
      %s34 = int_to_ptr.vmem [resolvable:$true] %s33
      %39 = dma.hbm_to_vmem [thread:$0]  %s32, 128, %s34, [#allocation6], 64, 64, 4
    $region9: #{tpu_custom_call.1} parent=1 // pred_fallthru
      _
    // Predicated region
    $region10: #{tpu_custom_call.1} parent=1 // pred_check
      _
    $region11: #{tpu_custom_call.1} parent=1 // pred_check_branch
      %41 = sbr.rel (0) target = $region13
    $region12: #{tpu_custom_call.1} parent=1 // pred_region
      _
    $region13: #{tpu_custom_call.1} parent=1 // pred_fallthru
      _
    // Predicated region
    $region14: #{tpu_custom_call.1} parent=1 // pred_check
      _
    $region15: #{tpu_custom_call.1} parent=1 // pred_check_branch
      %43 = sbr.rel (0) target = $region17
    $region16: #{tpu_custom_call.1} parent=1 // pred_region
      %45 = vsyncadd [#allocation6], 0
      %s46 = sshll.u32 %s3, 4
      %s47 = int_to_ptr.hbm [resolvable:$true] %s46
      %s48 = sshll.u32 [#allocation7], 4
      %s49 = int_to_ptr.vmem [resolvable:$true] %s48
      %54 = dma.hbm_to_vmem [thread:$0]  %s47, 256, %s49, [#allocation6], 64, 64, 4
    $region17: #{tpu_custom_call.1} parent=1 // pred_fallthru
      _
    // Predicated region
    $region18: #{tpu_custom_call.1} parent=1 // pred_check
      _
    $region19: #{tpu_custom_call.1} parent=1 // pred_check_branch
      %56 = sbr.rel (0) target = $region21
    $region20: #{tpu_custom_call.1} parent=1 // pred_region
      _
    $region21: #{tpu_custom_call.1} parent=1 // pred_fallthru
      _
    // Predicated region
    $region22: #{tpu_custom_call.1} parent=1 // pred_check
      _
    $region23: #{tpu_custom_call.1} parent=1 // pred_check_branch
      %58 = sbr.rel (0) target = $region25
    $region24: #{tpu_custom_call.1} parent=1 // pred_region
      %60 = vsyncadd [#allocation9], 0
      %s61 = sshll.u32 %s5, 4
      %s62 = int_to_ptr.hbm [resolvable:$true] %s61
      %s63 = sshll.u32 [#allocation8], 4
      %s64 = int_to_ptr.vmem [resolvable:$true] %s63
      %69 = dma.hbm_to_vmem [thread:$0]  %s62, 256, %s64, [#allocation9], 64, 64, 4
    $region25: #{tpu_custom_call.1} parent=1 // pred_fallthru
      _
    // Predicated region
    $region26: #{tpu_custom_call.1} parent=1 // pred_check
      _
    $region27: #{tpu_custom_call.1} parent=1 // pred_check_branch
      %71 = sbr.rel (0) target = $region29
    $region28: #{tpu_custom_call.1} parent=1 // pred_region
      _
    $region29: #{tpu_custom_call.1} parent=1 // pred_fallthru
      _
    // Predicated region
    $region30: #{tpu_custom_call.1} parent=1 // pred_check
      _
    $region31: #{tpu_custom_call.1} parent=1 // pred_check_branch
      %73 = sbr.rel (0) target = $region33
    $region32: #{tpu_custom_call.1} parent=1 // pred_region
      %75 = dma.done [#allocation3], 128
    $region33: #{tpu_custom_call.1} parent=1 // pred_fallthru
      _
    // Predicated region
    $region34: #{tpu_custom_call.1} parent=1 // pred_check
      _
    $region35: #{tpu_custom_call.1} parent=1 // pred_check_branch
      %77 = sbr.rel (0) target = $region37
    $region36: #{tpu_custom_call.1} parent=1 // pred_region
      %79 = dma.done [#allocation6], 128
    $region37: #{tpu_custom_call.1} parent=1 // pred_fallthru
      _
    // Predicated region
    $region38: #{tpu_custom_call.1} parent=1 // pred_check
      _
    $region39: #{tpu_custom_call.1} parent=1 // pred_check_branch
      %81 = sbr.rel (0) target = $region41
    $region40: #{tpu_custom_call.1} parent=1 // pred_region
      %83 = dma.done [#allocation6], 256
    $region41: #{tpu_custom_call.1} parent=1 // pred_fallthru
      _
    // Predicated region
    $region42: #{tpu_custom_call.1} parent=1 // pred_check
      _
    $region43: #{tpu_custom_call.1} parent=1 // pred_check_branch
      %85 = sbr.rel (0) target = $region45
    $region44: #{tpu_custom_call.1} parent=1 // pred_region
      %87 = dma.done [#allocation9], 256
    $region45: #{tpu_custom_call.1} parent=1 // pred_fallthru
      _
    %v89 = vld [vmem:[#allocation2] sm:$0xff]
    %v90 = vpack.c.bf16 %v89, %v89
    %v91 = vld [vmem:[#allocation5] sm:$0xf]
    %v92 = vld [vmem:[#allocation5 + $0x4] sm:$0xf]
    %v93 = vld [vmem:[%s2] sm:$0x1]
    %v95 = vperm.slane %v93, 0
    %v99 = vunpack.c.l.b16 %v91
    %v100 = vunpack.c.l.b16 %v92
    %v101 = vpack.c.b16 %v100, %v99
    %vm103 = vcmask 130048
    %v105 = vsel %vm103, %v90, 0
    %107 = vmatpush.bf16.msra.mxu0 0
    %108 = vmatpush.bf16.msra.mxu0 0
    %109 = vmatpush.bf16.msra.mxu0 0
    %110 = vmatpush.bf16.msra.mxu0 0
    %111 = vmatpush.bf16.msra.mxu0 0
    %112 = vmatpush.bf16.msra.mxu0 0
    %113 = vmatpush.bf16.msra.mxu0 0
    %114 = vmatpush.bf16.msra.mxu0 %v101
    %115 = vmatmul.bf16.gmra.mxu0 %v105
    %v116 = vpop.f32.mrf.mxu0
    %v117 = vadd.f32 %v95, %v116
    %v118 = vpop.f32.mrf.mxu0
    %119 = vdwg.mxu0
    %v120 = vmax.f32 %v117, 0.0
    %v121 = vpack.c.bf16 %v120, %v120
    %v122 = vld [vmem:[#allocation7] sm:$0xf]
    %v123 = vld [vmem:[#allocation7 + $0x4] sm:$0xf]
    %v124 = vld [vmem:[#allocation7 + $0x8] sm:$0xf]
    %v125 = vld [vmem:[#allocation7 + $0xc] sm:$0xf]
    %v126 = vld [vmem:[%s4] sm:$0x1]
    %v128 = vperm.slane %v126, 0
    %v134 = vunpack.c.l.b16 %v122
    %v135 = vunpack.c.l.b16 %v123
    %v136 = vunpack.c.l.b16 %v124
    %v137 = vunpack.c.l.b16 %v125
    %v138 = vpack.c.b16 %v135, %v134
    %v139 = vpack.c.b16 %v137, %v136
    %vm142 = vcmask 261120
    %v144 = vsel %vm142, %v121, 0
    %146 = vmatpush.bf16.msra.mxu0 0
    %147 = vmatpush.bf16.msra.mxu0 0
    %148 = vmatpush.bf16.msra.mxu0 0
    %149 = vmatpush.bf16.msra.mxu0 0
    %150 = vmatpush.bf16.msra.mxu0 0
    %151 = vmatpush.bf16.msra.mxu0 0
    %152 = vmatpush.bf16.msra.mxu0 %v139
    %153 = vmatpush.bf16.msra.mxu0 %v138
    %154 = vmatmul.bf16.gmra.mxu0 %v144
    %v155 = vpop.f32.mrf.mxu0
    %v156 = vadd.f32 %v128, %v155
    %v157 = vpop.f32.mrf.mxu0
    %158 = vdwg.mxu0
    %v159 = vmax.f32 %v156, 0.0
    %v160 = vpack.c.bf16 %v159, %v159
    %v161 = vld [vmem:[#allocation8] sm:$0xf]
    %v162 = vld [vmem:[#allocation8 + $0x4] sm:$0xf]
    %v163 = vld [vmem:[#allocation8 + $0x8] sm:$0xf]
    %v164 = vld [vmem:[#allocation8 + $0xc] sm:$0xf]
    %v165 = vld [vmem:[%s6] sm:$0x1]
    %v167 = vperm.slane %v165, 0
    %v173 = vunpack.c.l.b16 %v161
    %v174 = vunpack.c.l.b16 %v162
    %v175 = vunpack.c.l.b16 %v163
    %v176 = vunpack.c.l.b16 %v164
    %v177 = vpack.c.b16 %v174, %v173
    %v178 = vpack.c.b16 %v176, %v175
    %v182 = vsel %vm142, %v160, 0
    %184 = vmatpush.bf16.msra.mxu0 0
    %185 = vmatpush.bf16.msra.mxu0 0
    %186 = vmatpush.bf16.msra.mxu0 0
    %187 = vmatpush.bf16.msra.mxu0 0
    %188 = vmatpush.bf16.msra.mxu0 0
    %189 = vmatpush.bf16.msra.mxu0 0
    %190 = vmatpush.bf16.msra.mxu0 %v178
    %191 = vmatpush.bf16.msra.mxu0 %v177
    %192 = vmatmul.bf16.gmra.mxu0 %v182
    %v193 = vpop.f32.mrf.mxu0
    %v194 = vadd.f32 %v167, %v193
    %v195 = vpop.f32.mrf.mxu0
    %196 = vdwg.mxu0
    %197 = vst.msk [vmem:[#allocation10] sm:$0xff] %vm142, %v194
    // Predicated region
    $region46: #{tpu_custom_call.1} parent=1 // pred_check
      _
    $region47: #{tpu_custom_call.1} parent=1 // pred_check_branch
      %199 = sbr.rel (0) target = $region49
    $region48: #{tpu_custom_call.1} parent=1 // pred_region
      %201 = vsyncadd [#allocation4], 0
      %s203 = sshll.u32 [#allocation10], 4
      %s204 = int_to_ptr.vmem [resolvable:$true] %s203
      %s205 = sshll.u32 %s7, 4
      %s206 = int_to_ptr.hbm [resolvable:$true] %s205
      %208 = dma.vmem_to_hbm [thread:$0]  %s204, 128, %s206, [#allocation4]
    $region49: #{tpu_custom_call.1} parent=1 // pred_fallthru
      _
    // Predicated region
    $region50: #{tpu_custom_call.1} parent=1 // pred_check
      _
    $region51: #{tpu_custom_call.1} parent=1 // pred_check_branch
      %210 = sbr.rel (0) target = $region53
    $region52: #{tpu_custom_call.1} parent=1 // pred_region
      %212 = dma.done [#allocation4], 128
    $region53: #{tpu_custom_call.1} parent=1 // pred_fallthru
      _
    %213 = vsyncpa [#allocation3], 1
    %214 = vsyncpa [#allocation6], 1
    %215 = vsyncpa [#allocation9], 1
    %216 = vsyncpa [#allocation4], 1

</llo_original>
